<compile_context>
chip_gen: v6e
topology: v6e:2x2x1
jax: 0.10.0
libtpu: 0.0.40
codegen_flags: <defaults>
</compile_context>

<pallas_src>
import functools

import jax
import jax.numpy as jnp
from jax.experimental import pallas as pl
from jax.experimental.pallas import tpu as pltpu


def _round_up(x, m):
    return ((x + m - 1) // m) * m


def _pick_block_m(m, d, num_layers, act_bytes, budget=40 * 1024 * 1024):
    """Largest row tile (<=512) s.t. double-buffered activation tiles + the
    VMEM-resident weight stack fit a conservative per-core VMEM budget
    (sized for v7x's 64 MiB per-TensorCore VMEM with headroom)."""
    w_bytes = 2 * (num_layers * d * d * act_bytes + num_layers * d * 4 + 2 * d * 4)
    tm = 512
    while tm > 8:
        act = 4 * tm * d * act_bytes + 8 * tm * d * 4  # in/out (x2 bufs) + f32 temps
        if w_bytes + act <= budget:
            break
        tm //= 2
    # TODO(synk): if the weight stack alone exceeds the VMEM budget (very large
    # d_model), switch to a K/N-tiled variant with an f32 accumulator instead of
    # keeping all layer weights VMEM-resident.
    return max(tm, 8)


def _encoder_kernel(x_ref, w_ref, b_ref, g_ref, bb_ref, o_ref, *, num_layers, eps):
    # x_ref : (tm, D)   compute dtype (f32 or bf16)
    # w_ref : (L, D, D) compute dtype (VMEM-resident across row tiles)
    # b_ref : (L, 1, D) f32
    # g_ref : (1, D)    f32  (LayerNorm a_2)
    # bb_ref: (1, D)    f32  (LayerNorm b_2)
    h = x_ref[...]
    for layer in range(num_layers):  # small static trip count -> unrolled
        y = jnp.dot(h, w_ref[layer], preferred_element_type=jnp.float32)
        y = y + b_ref[layer]                      # (1, D) broadcast, f32 epilogue
        h = jnp.maximum(y, 0.0).astype(h.dtype)
        # TODO(synk): training-mode dropout (stochastic masking) not implemented;
        # eval-mode dropout is the identity, which is what is reproduced here.

    # Final LayerNorm: a_2 * (x - mean) / (std + eps) + b_2, torch-style
    # unbiased std (ddof=1), eps added to std (not variance). All in f32.
    hf = h.astype(jnp.float32)
    d = hf.shape[-1]
    mean = jnp.mean(hf, axis=-1, keepdims=True)
    cen = hf - mean
    var = jnp.sum(cen * cen, axis=-1, keepdims=True) / (d - 1)
    std = jnp.sqrt(var)
    out = g_ref[...] * cen / (std + eps) + bb_ref[...]
    o_ref[...] = out.astype(o_ref.dtype)


def encoder_forward(x, weights, biases, gamma, beta, x_mask=None, *,
                    eps=1e-6, compute_dtype=None, block_m=None):
    """Fused Encoder forward.

    x       : (..., D) activations; leading dims are flattened into rows.
    weights : (L, D, D) stacked per-layer weights, stored (in, out).
    biases  : (L, D)    stacked per-layer biases.
    gamma   : (D,)      LayerNorm a_2.
    beta    : (D,)      LayerNorm b_2.
    x_mask  : accepted but unused.
              # TODO(synk): the cloned `layer` submodule (and its use of x_mask,
              # e.g. attention masking) is not defined in the spec.
    """
    del x_mask
    orig_shape = x.shape
    d_model = x.shape[-1]
    num_layers = weights.shape[0]
    assert weights.shape == (num_layers, d_model, d_model)
    assert biases.shape == (num_layers, d_model)

    out_dtype = x.dtype
    cdt = jnp.dtype(compute_dtype) if compute_dtype is not None else jnp.dtype(x.dtype)
    act_bytes = cdt.itemsize
    sub = 16 if act_bytes < 4 else 8  # sublane packing multiple for the row tile

    x2 = x.reshape(-1, d_model).astype(cdt)
    m = x2.shape[0]

    if block_m is None:
        block_m = _pick_block_m(m, d_model, num_layers, act_bytes)
    tm = min(block_m, _round_up(m, sub))
    tm = _round_up(tm, sub)
    mp = _round_up(m, tm)
    if mp != m:
        x2 = jnp.pad(x2, ((0, mp - m), (0, 0)))

    w = weights.astype(cdt)
    b = biases.astype(jnp.float32).reshape(num_layers, 1, d_model)
    g = gamma.astype(jnp.float32).reshape(1, d_model)
    bb = beta.astype(jnp.float32).reshape(1, d_model)

    grid = (mp // tm,)

    # Advisory cost estimate for XLA scheduling around the custom call.
    flops = 2 * mp * d_model * d_model * num_layers + 12 * mp * d_model
    bytes_accessed = (x2.size * act_bytes + w.size * act_bytes
                      + (b.size + g.size + bb.size) * 4
                      + mp * d_model * jnp.dtype(out_dtype).itemsize)
    cost = pl.CostEstimate(flops=int(flops), transcendentals=int(mp),
                           bytes_accessed=int(bytes_accessed))

    # Explicit VMEM budget: double-buffered row tiles + resident weights + temps.
    vmem_need = (2 * (tm * d_model * act_bytes
                      + tm * d_model * jnp.dtype(out_dtype).itemsize)
                 + 2 * (w.size * act_bytes + (b.size + g.size + bb.size) * 4)
                 + 8 * tm * d_model * 4)
    vmem_limit = int(min(max(vmem_need + (2 << 20), 16 << 20), 64 << 20))

    kernel = functools.partial(_encoder_kernel, num_layers=num_layers, eps=eps)

    out = pl.pallas_call(
        kernel,
        out_shape=jax.ShapeDtypeStruct((mp, d_model), out_dtype),
        grid=grid,
        in_specs=[
            pl.BlockSpec((tm, d_model), lambda i: (i, 0)),
            pl.BlockSpec((num_layers, d_model, d_model), lambda i: (0, 0, 0)),
            pl.BlockSpec((num_layers, 1, d_model), lambda i: (0, 0, 0)),
            pl.BlockSpec((1, d_model), lambda i: (0, 0)),
            pl.BlockSpec((1, d_model), lambda i: (0, 0)),
        ],
        out_specs=pl.BlockSpec((tm, d_model), lambda i: (i, 0)),
        compiler_params=pltpu.CompilerParams(
            dimension_semantics=("parallel",),
            vmem_limit_bytes=vmem_limit),
        cost_estimate=cost,
    )(x2, w, b, g, bb)

    return out[:m].reshape(orig_shape)


def init_encoder_params(key, d_model, num_layers, dtype=jnp.float32):
    """Deterministic synthetic parameters. Weight layout is (in, out)
    (pre-transposed relative to torch.nn.Linear's (out, in))."""
    kw, kb, kg, kbt = jax.random.split(key, 4)
    bound = 1.0 / (d_model ** 0.5)
    weights = jax.random.uniform(kw, (num_layers, d_model, d_model), dtype,
                                 -bound, bound)
    biases = jax.random.uniform(kb, (num_layers, d_model), dtype, -bound, bound)
    gamma = jnp.ones((d_model,), dtype) + 0.1 * jax.random.normal(kg, (d_model,), dtype)
    beta = 0.1 * jax.random.normal(kbt, (d_model,), dtype)
    return weights, biases, gamma, beta


def encoder_reference(x, weights, biases, gamma, beta, eps=1e-6):
    """Pure-JAX f32 reference for correctness checking."""
    d_model = x.shape[-1]
    h = x.reshape(-1, d_model).astype(jnp.float32)
    for layer in range(weights.shape[0]):
        h = jnp.maximum(jnp.dot(h, weights[layer].astype(jnp.float32))
                        + biases[layer].astype(jnp.float32), 0.0)
    mean = jnp.mean(h, axis=-1, keepdims=True)
    cen = h - mean
    var = jnp.sum(cen * cen, axis=-1, keepdims=True) / (d_model - 1)
    std = jnp.sqrt(var)
    out = gamma.astype(jnp.float32) * cen / (std + eps) + beta.astype(jnp.float32)
    return out.reshape(x.shape).astype(x.dtype)


if __name__ == "__main__":
    batch, seq, d_model, num_layers = 2, 128, 128, 2

    key = jax.random.PRNGKey(0)
    key, kx = jax.random.split(key)
    x = jax.random.normal(kx, (batch, seq, d_model), jnp.float32)
    x_mask = jnp.ones((batch, 1, seq), jnp.float32)  # unused by these layers

    weights, biases, gamma, beta = init_encoder_params(key, d_model, num_layers)

    ref = encoder_reference(x, weights, biases, gamma, beta)

    # f32 path, multi-tile grid (block_m=64 -> 4 row tiles on the "parallel" axis).
    out = encoder_forward(x, weights, biases, gamma, beta, x_mask, block_m=64)
    out = jax.block_until_ready(out)
    assert out.shape == x.shape
    assert jnp.allclose(out, ref, atol=1e-4, rtol=1e-4), "f32 mismatch vs reference"

    # bf16 compute path (MXU-native on v6e/v7x): bf16 activations/weights,
    # f32 accumulation + f32 epilogue; compared loosely against the f32 reference.
    out_bf16 = encoder_forward(x, weights, biases, gamma, beta, x_mask,
                               compute_dtype=jnp.bfloat16)
    out_bf16 = jax.block_until_ready(out_bf16)
    assert jnp.allclose(out_bf16, ref, atol=5e-2, rtol=5e-2), "bf16 mismatch vs reference"

    print("KERNEL_OK")
</pallas_src>

<mosaic_0001>
module attributes {stable_mosaic.version = 11 : i64} {
  func.func @_encoder_kernel(%arg0: i32, %arg1: memref<64x128xf32, #tpu.memory_space<vmem>>, %arg2: memref<2x128x128xf32, #tpu.memory_space<vmem>>, %arg3: memref<2x1x128xf32, #tpu.memory_space<vmem>>, %arg4: memref<1x128xf32, #tpu.memory_space<vmem>>, %arg5: memref<1x128xf32, #tpu.memory_space<vmem>>, %arg6: memref<64x128xf32, #tpu.memory_space<vmem>>) attributes {dimension_semantics = [#tpu.dimension_semantics<parallel>], iteration_bounds = array<i64: 4>, scalar_prefetch = 0 : i64, scratch_operands = 0 : i64, tpu.core_type = #tpu.core_type<tc>, window_params = [{transform_indices = @transform_0, window_bounds = array<i64: 64, 128>}, {pipeline_mode = #tpu.pipeline_mode<synchronous>, transform_indices = @transform_1, window_bounds = array<i64: 2, 128, 128>}, {pipeline_mode = #tpu.pipeline_mode<synchronous>, transform_indices = @transform_2, window_bounds = array<i64: 2, 1, 128>}, {pipeline_mode = #tpu.pipeline_mode<synchronous>, transform_indices = @transform_3, window_bounds = array<i64: 1, 128>}, {pipeline_mode = #tpu.pipeline_mode<synchronous>, transform_indices = @transform_4, window_bounds = array<i64: 1, 128>}, {transform_indices = @transform_5, window_bounds = array<i64: 64, 128>}]} {
    %c0 = arith.constant 0 : index
    %c0_0 = arith.constant 0 : index
    %0 = vector.load %arg1[%c0, %c0_0] : memref<64x128xf32, #tpu.memory_space<vmem>>, vector<64x128xf32>
    %c0_1 = arith.constant 0 : index
    %c0_2 = arith.constant 0 : index
    %c0_3 = arith.constant 0 : index
    %1 = vector.load %arg2[%c0_1, %c0_2, %c0_3] : memref<2x128x128xf32, #tpu.memory_space<vmem>>, vector<1x128x128xf32>
    %2 = vector.shape_cast %1 : vector<1x128x128xf32> to vector<128x128xf32>
    %cst = arith.constant dense<0.000000e+00> : vector<64x128xf32>
    %3 = tpu.matmul %0, %2, %cst {dimension_numbers = #tpu.dot_dimension_numbers<[1], [0], [0], [1], [0, 0, 1, 1], [], []>} : vector<64x128xf32>, vector<128x128xf32>, vector<64x128xf32> -> vector<64x128xf32>
    %c0_4 = arith.constant 0 : index
    %c0_5 = arith.constant 0 : index
    %c0_6 = arith.constant 0 : index
    %4 = vector.load %arg3[%c0_4, %c0_5, %c0_6] : memref<2x1x128xf32, #tpu.memory_space<vmem>>, vector<1x1x128xf32>
    %5 = vector.shape_cast %4 : vector<1x1x128xf32> to vector<1x128xf32>
    %6 = vector.broadcast %5 : vector<1x128xf32> to vector<64x128xf32>
    %7 = arith.addf %3, %6 : vector<64x128xf32>
    %cst_7 = arith.constant 0.000000e+00 : f32
    %8 = vector.broadcast %cst_7 : f32 to vector<64x128xf32>
    %9 = arith.maximumf %7, %8 : vector<64x128xf32>
    %c1 = arith.constant 1 : index
    %c0_8 = arith.constant 0 : index
    %c0_9 = arith.constant 0 : index
    %10 = vector.load %arg2[%c1, %c0_8, %c0_9] : memref<2x128x128xf32, #tpu.memory_space<vmem>>, vector<1x128x128xf32>
    %11 = vector.shape_cast %10 : vector<1x128x128xf32> to vector<128x128xf32>
    %cst_10 = arith.constant dense<0.000000e+00> : vector<64x128xf32>
    %12 = tpu.matmul %9, %11, %cst_10 {dimension_numbers = #tpu.dot_dimension_numbers<[1], [0], [0], [1], [0, 0, 1, 1], [], []>} : vector<64x128xf32>, vector<128x128xf32>, vector<64x128xf32> -> vector<64x128xf32>
    %c1_11 = arith.constant 1 : index
    %c0_12 = arith.constant 0 : index
    %c0_13 = arith.constant 0 : index
    %13 = vector.load %arg3[%c1_11, %c0_12, %c0_13] : memref<2x1x128xf32, #tpu.memory_space<vmem>>, vector<1x1x128xf32>
    %14 = vector.shape_cast %13 : vector<1x1x128xf32> to vector<1x128xf32>
    %15 = vector.broadcast %14 : vector<1x128xf32> to vector<64x128xf32>
    %16 = arith.addf %12, %15 : vector<64x128xf32>
    %cst_14 = arith.constant 0.000000e+00 : f32
    %17 = vector.broadcast %cst_14 : f32 to vector<64x128xf32>
    %18 = arith.maximumf %16, %17 : vector<64x128xf32>
    %cst_15 = arith.constant dense<0.000000e+00> : vector<64xf32>
    %19 = vector.multi_reduction <add>, %18, %cst_15 [1] : vector<64x128xf32> to vector<64xf32>
    %20 = vector.shape_cast %19 : vector<64xf32> to vector<64x1xf32>
    %cst_16 = arith.constant 1.280000e+02 : f32
    %21 = vector.broadcast %cst_16 : f32 to vector<64x1xf32>
    %22 = arith.divf %20, %21 : vector<64x1xf32>
    %23 = vector.broadcast %22 : vector<64x1xf32> to vector<64x128xf32>
    %24 = arith.subf %18, %23 : vector<64x128xf32>
    %25 = arith.mulf %24, %24 : vector<64x128xf32>
    %cst_17 = arith.constant dense<0.000000e+00> : vector<64xf32>
    %26 = vector.multi_reduction <add>, %25, %cst_17 [1] : vector<64x128xf32> to vector<64xf32>
    %27 = vector.shape_cast %26 : vector<64xf32> to vector<64x1xf32>
    %cst_18 = arith.constant 1.270000e+02 : f32
    %28 = vector.broadcast %cst_18 : f32 to vector<64x1xf32>
    %29 = arith.divf %27, %28 : vector<64x1xf32>
    %30 = math.sqrt %29 : vector<64x1xf32>
    %c0_19 = arith.constant 0 : index
    %c0_20 = arith.constant 0 : index
    %31 = vector.load %arg4[%c0_19, %c0_20] : memref<1x128xf32, #tpu.memory_space<vmem>>, vector<1x128xf32>
    %32 = vector.broadcast %31 : vector<1x128xf32> to vector<64x128xf32>
    %33 = arith.mulf %32, %24 : vector<64x128xf32>
    %cst_21 = arith.constant 9.99999997E-7 : f32
    %34 = vector.broadcast %cst_21 : f32 to vector<64x1xf32>
    %35 = arith.addf %30, %34 : vector<64x1xf32>
    %36 = vector.broadcast %35 : vector<64x1xf32> to vector<64x128xf32>
    %37 = arith.divf %33, %36 : vector<64x128xf32>
    %c0_22 = arith.constant 0 : index
    %c0_23 = arith.constant 0 : index
    %38 = vector.load %arg5[%c0_22, %c0_23] : memref<1x128xf32, #tpu.memory_space<vmem>>, vector<1x128xf32>
    %39 = vector.broadcast %38 : vector<1x128xf32> to vector<64x128xf32>
    %40 = arith.addf %37, %39 : vector<64x128xf32>
    %c0_24 = arith.constant 0 : index
    %c0_25 = arith.constant 0 : index
    %41 = vector.load %arg6[%c0_24, %c0_25] : memref<64x128xf32, #tpu.memory_space<vmem>>, vector<64x128xf32>
    tpu.vector_store %arg6[%c0_24, %c0_25], %40 {strides = array<i32>} : memref<64x128xf32, #tpu.memory_space<vmem>>, vector<64x128xf32>,
    return
  }
  func.func @transform_0(%arg0: i32) -> (i32, i32) {
    %c0_i32 = arith.constant 0 : i32
    %c0_i32_0 = arith.constant 0 : i32
    return %arg0, %c0_i32 : i32, i32
  }
  func.func @transform_1(%arg0: i32) -> (i32, i32, i32) {
    %c0_i32 = arith.constant 0 : i32
    %c0_i32_0 = arith.constant 0 : i32
    %c0_i32_1 = arith.constant 0 : i32
    %c0_i32_2 = arith.constant 0 : i32
    return %c0_i32, %c0_i32_0, %c0_i32_1 : i32, i32, i32
  }
  func.func @transform_2(%arg0: i32) -> (i32, i32, i32) {
    %c0_i32 = arith.constant 0 : i32
    %c0_i32_0 = arith.constant 0 : i32
    %c0_i32_1 = arith.constant 0 : i32
    %c0_i32_2 = arith.constant 0 : i32
    return %c0_i32, %c0_i32_0, %c0_i32_1 : i32, i32, i32
  }
  func.func @transform_3(%arg0: i32) -> (i32, i32) {
    %c0_i32 = arith.constant 0 : i32
    %c0_i32_0 = arith.constant 0 : i32
    %c0_i32_1 = arith.constant 0 : i32
    return %c0_i32, %c0_i32_0 : i32, i32
  }
  func.func @transform_4(%arg0: i32) -> (i32, i32) {
    %c0_i32 = arith.constant 0 : i32
    %c0_i32_0 = arith.constant 0 : i32
    %c0_i32_1 = arith.constant 0 : i32
    return %c0_i32, %c0_i32_0 : i32, i32
  }
  func.func @transform_5(%arg0: i32) -> (i32, i32) {
    %c0_i32 = arith.constant 0 : i32
    %c0_i32_0 = arith.constant 0 : i32
    return %arg0, %c0_i32 : i32, i32
  }
}

</mosaic_0001>

<llo_original>
// kernel: tpu_custom_call.1
$region0: #{tpu_custom_call.1}
  #allocation0 [shape = 'u32[]', space=smem, size = 0x4, offset = 0x4, fixed_abs, tag = 'smem constant byte address 0x4 - core index']
  #allocation1 [shape = 'u32[144,128]{1,0:T(1,128)}', space=vmem, size = 0x12000, scoped, tag = 'internal scratch']
  %s0 = inlined_call_operand.hbm [shape: f32[256,128], index: 0, kind: input, shape index: {}]
  %s1 = inlined_call_operand.hbm [shape: f32[2,128,128], index: 1, kind: input, shape index: {}]
  %s2 = inlined_call_operand.vmem [shape: f32[2,1,128], index: 2, kind: input, shape index: {}]
  %s3 = inlined_call_operand.vmem [shape: f32[1,128], index: 3, kind: input, shape index: {}]
  %s4 = inlined_call_operand.vmem [shape: f32[1,128], index: 4, kind: input, shape index: {}]
  %s5 = inlined_call_operand.hbm [shape: f32[256,128], index: 5, kind: output, shape index: {}]
  %s6 = sld [smem:[#allocation0]]
  $region61: #{tpu_custom_call.1} parent=0
    _
  %s8 = ssub.s32 1, %s6
  %s9 = scalar_select 0, %s8, %s6
  $region1: #{tpu_custom_call.1} parent=0
    #allocation2 [shape = 'u8[65536]{0}', space=vmem, size = 0x10000, scoped, tag = 'input window, operand 0']
    #allocation3 [shape = 's32[2]{0}', space=sflag, size = 0x8, scoped, tag = 'scoped memory for tpu_custom_call.1']
    #allocation4 [shape = 's32[2]{0}', space=sflag, size = 0x8, scoped, tag = 'scoped memory for tpu_custom_call.1']
    #allocation5 [shape = 'u8[131072]{0}', space=vmem, size = 0x20000, scoped, tag = 'input window, operand 1, single buffered']
    #allocation6 [shape = 's32[1]{0}', space=sflag, size = 0x4, scoped, tag = 'scoped memory for tpu_custom_call.1']
    #allocation7 [shape = 'u8[65536]{0}', space=vmem, size = 0x10000, scoped, tag = 'output window, operand 0']
    %10 = vsyncpa [#allocation3], 0
    %s11 = scalar_lea.sflag [#allocation3], 1
    %12 = vsyncpa %s11, 0
    %13 = vsyncpa [#allocation6], 0
    %14 = vsyncpa [#allocation4], 0
    %s15 = scalar_lea.sflag [#allocation4], 1
    %16 = vsyncpa %s15, 0
    loop: start=0, step=1, limit=6
    $region2: #{tpu_custom_call.1} parent=1 // loop_pre_header
      _
    $region3: #{tpu_custom_call.1} parent=1 // loop_header
      %s18 = sphi 0, %s22
      %p19 = scmp.ge.s32.totalorder %s18, 6
      %s28 = sphi 0, %s30
      %s31 = sphi 0, %s28
      %s32 = sphi 0, %s31
      %s48 = sphi 0, %s32
      %s52 = sphi 0, %s52
      %s54 = sphi 0, %s52
      %s55 = sphi 0, %s54
      %s69 = sphi 0, %s55
      %s73 = sphi 0, %s73
      %s75 = sphi 0, %s73
      %s76 = sphi 0, %s75
      %s90 = sphi 0, %s76
      %s94 = sphi 0, %s94
      %s96 = sphi 0, %s94
      %s97 = sphi 0, %s96
      %s111 = sphi 0, %s97
      %s115 = sphi 0, %s115
      %s117 = sphi 0, %s115
      %s118 = sphi 0, %s117
      %s132 = sphi 0, %s118
      %s138 = sphi 0, %s140
      %s141 = sphi 0, %s138
      %s142 = sphi 0, %s141
      %s158 = sphi 0, %s142
    $region4: #{tpu_custom_call.1} parent=1 // loop_header_branch
      %21 = sbr.rel (%p19) target = $region8
    $region5: #{tpu_custom_call.1} parent=1 // loop_body
      %s23 = ssub.s32 %s18, 1
      %s24 = ssub.s32 %s18, 2
      %s25 = sadd.s32 %s18, 1
      %s26 = ssub.s32 %s18, %s25
      %p27 = scmp.eq.s32.totalorder %s26, 0
      %s29 = sadd.s32 %s28, 1
      %s30 = scalar_select %p27, %s28, %s29
      %p33 = pneg %p27
      %p34 = scmp.eq.s32.totalorder %s18, 3
      %p35 = por %p33, %p34
      %p36 = scmp.ne.s32.totalorder %s28, %s31
      %p37 = scmp.eq.s32.totalorder %s18, 0
      %p38 = por %p36, %p37
      %p39 = scmp.ne.s32.totalorder %s28, %s31
      %p40 = scmp.eq.s32.totalorder %s23, 3
      %p41 = por %p39, %p40
      %p42 = scmp.ne.s32.totalorder %s31, %s32
      %p43 = scmp.eq.s32.totalorder %s23, 0
      %p44 = por %p42, %p43
      %p45 = scmp.ne.s32.totalorder %s31, %s32
      %p46 = scmp.eq.s32.totalorder %s24, 3
      %p47 = por %p45, %p46
      %p49 = scmp.ne.s32.totalorder %s32, %s48
      %p50 = scmp.eq.s32.totalorder %s24, 0
      %p51 = por %p49, %p50
      %s53 = sadd.s32 %s52, 1
      %p56 = scmp.eq.s32.totalorder %s18, 3
      %p57 = scmp.ne.s32.totalorder %s52, %s54
      %p58 = scmp.eq.s32.totalorder %s18, 0
      %p59 = por %p57, %p58
      %p60 = scmp.ne.s32.totalorder %s52, %s54
      %p61 = scmp.eq.s32.totalorder %s23, 3
      %p62 = por %p60, %p61
      %p63 = scmp.ne.s32.totalorder %s54, %s55
      %p64 = scmp.eq.s32.totalorder %s23, 0
      %p65 = por %p63, %p64
      %p66 = scmp.ne.s32.totalorder %s54, %s55
      %p67 = scmp.eq.s32.totalorder %s24, 3
      %p68 = por %p66, %p67
      %p70 = scmp.ne.s32.totalorder %s55, %s69
      %p71 = scmp.eq.s32.totalorder %s24, 0
      %p72 = por %p70, %p71
      %s74 = sadd.s32 %s73, 1
      %p77 = scmp.eq.s32.totalorder %s18, 3
      %p78 = scmp.ne.s32.totalorder %s73, %s75
      %p79 = scmp.eq.s32.totalorder %s18, 0
      %p80 = por %p78, %p79
      %p81 = scmp.ne.s32.totalorder %s73, %s75
      %p82 = scmp.eq.s32.totalorder %s23, 3
      %p83 = por %p81, %p82
      %p84 = scmp.ne.s32.totalorder %s75, %s76
      %p85 = scmp.eq.s32.totalorder %s23, 0
      %p86 = por %p84, %p85
      %p87 = scmp.ne.s32.totalorder %s75, %s76
      %p88 = scmp.eq.s32.totalorder %s24, 3
      %p89 = por %p87, %p88
      %p91 = scmp.ne.s32.totalorder %s76, %s90
      %p92 = scmp.eq.s32.totalorder %s24, 0
      %p93 = por %p91, %p92
      %s95 = sadd.s32 %s94, 1
      %p98 = scmp.eq.s32.totalorder %s18, 3
      %p99 = scmp.ne.s32.totalorder %s94, %s96
      %p100 = scmp.eq.s32.totalorder %s18, 0
      %p101 = por %p99, %p100
      %p102 = scmp.ne.s32.totalorder %s94, %s96
      %p103 = scmp.eq.s32.totalorder %s23, 3
      %p104 = por %p102, %p103
      %p105 = scmp.ne.s32.totalorder %s96, %s97
      %p106 = scmp.eq.s32.totalorder %s23, 0
      %p107 = por %p105, %p106
      %p108 = scmp.ne.s32.totalorder %s96, %s97
      %p109 = scmp.eq.s32.totalorder %s24, 3
      %p110 = por %p108, %p109
      %p112 = scmp.ne.s32.totalorder %s97, %s111
      %p113 = scmp.eq.s32.totalorder %s24, 0
      %p114 = por %p112, %p113
      %s116 = sadd.s32 %s115, 1
      %p119 = scmp.eq.s32.totalorder %s18, 3
      %p120 = scmp.ne.s32.totalorder %s115, %s117
      %p121 = scmp.eq.s32.totalorder %s18, 0
      %p122 = por %p120, %p121
      %p123 = scmp.ne.s32.totalorder %s115, %s117
      %p124 = scmp.eq.s32.totalorder %s23, 3
      %p125 = por %p123, %p124
      %p126 = scmp.ne.s32.totalorder %s117, %s118
      %p127 = scmp.eq.s32.totalorder %s23, 0
      %p128 = por %p126, %p127
      %p129 = scmp.ne.s32.totalorder %s117, %s118
      %p130 = scmp.eq.s32.totalorder %s24, 3
      %p131 = por %p129, %p130
      %p133 = scmp.ne.s32.totalorder %s118, %s132
      %p134 = scmp.eq.s32.totalorder %s24, 0
      %p135 = por %p133, %p134
      %s136 = ssub.s32 %s18, %s25
      %p137 = scmp.eq.s32.totalorder %s136, 0
      %s139 = sadd.s32 %s138, 1
      %s140 = scalar_select %p137, %s138, %s139
      %p143 = pneg %p137
      %p144 = scmp.eq.s32.totalorder %s18, 3
      %p145 = por %p143, %p144
      %p146 = scmp.ne.s32.totalorder %s138, %s141
      %p147 = scmp.eq.s32.totalorder %s18, 0
      %p148 = por %p146, %p147
      %p149 = scmp.ne.s32.totalorder %s138, %s141
      %p150 = scmp.eq.s32.totalorder %s23, 3
      %p151 = por %p149, %p150
      %p152 = scmp.ne.s32.totalorder %s141, %s142
      %p153 = scmp.eq.s32.totalorder %s23, 0
      %p154 = por %p152, %p153
      %p155 = scmp.ne.s32.totalorder %s141, %s142
      %p156 = scmp.eq.s32.totalorder %s24, 3
      %p157 = por %p155, %p156
      %p159 = scmp.ne.s32.totalorder %s142, %s158
      %p160 = scmp.eq.s32.totalorder %s24, 0
      %p161 = por %p159, %p160
      %p162 = scmp.le.s32.totalorder 1, %s18
      %p163 = scmp.lt.s32.totalorder %s18, 5
      %p164 = pnand %p162, %p163
      %p165 = pneg %p164
      // Predicated region
      $region9: #{tpu_custom_call.1} parent=5 // pred_check
        _
      $region10: #{tpu_custom_call.1} parent=5 // pred_check_branch
        %167 = sbr.rel (%p164) target = $region12
      $region11: #{tpu_custom_call.1} parent=5 // pred_region
        %s168 = ssub.s32 %s18, 1
        // Predicated region
        $region13: #{tpu_custom_call.1} parent=11 // pred_check
          %p169 = pneg %p65
        $region14: #{tpu_custom_call.1} parent=11 // pred_check_branch
          %171 = sbr.rel (%p169) target = $region16
        $region15: #{tpu_custom_call.1} parent=11 // pred_region
          %s173 = ssub.s32 4096, 4096
          %174 = vsyncadd [#allocation6], %s173
          %s175 = sshll.u32 [#allocation5], 4
          %s176 = int_to_ptr.vmem [resolvable:$true] %s175
          %181 = dma.hbm_to_vmem [thread:$0]  %s1, 4096, %s176, [#allocation6], 128, 128, 8
        $region16: #{tpu_custom_call.1} parent=11 // pred_fallthru
          _
        // Predicated region
        $region17: #{tpu_custom_call.1} parent=11 // pred_check
          %p182 = pneg %p86
        $region18: #{tpu_custom_call.1} parent=11 // pred_check_branch
          %184 = sbr.rel (%p182) target = $region20
        $region19: #{tpu_custom_call.1} parent=11 // pred_region
          _
        $region20: #{tpu_custom_call.1} parent=11 // pred_fallthru
          _
        // Predicated region
        $region21: #{tpu_custom_call.1} parent=11 // pred_check
          %p185 = pneg %p107
        $region22: #{tpu_custom_call.1} parent=11 // pred_check_branch
          %187 = sbr.rel (%p185) target = $region24
        $region23: #{tpu_custom_call.1} parent=11 // pred_region
          _
        $region24: #{tpu_custom_call.1} parent=11 // pred_fallthru
          _
        // Predicated region
        $region25: #{tpu_custom_call.1} parent=11 // pred_check
          %p188 = pneg %p128
        $region26: #{tpu_custom_call.1} parent=11 // pred_check_branch
          %190 = sbr.rel (%p188) target = $region28
        $region27: #{tpu_custom_call.1} parent=11 // pred_region
          _
        $region28: #{tpu_custom_call.1} parent=11 // pred_fallthru
          _
      $region12: #{tpu_custom_call.1} parent=5 // pred_fallthru
        _
      %p191 = scmp.lt.s32.totalorder %s18, 4
      // Predicated region
      $region29: #{tpu_custom_call.1} parent=5 // pred_check
        %p192 = pneg %p191
      $region30: #{tpu_custom_call.1} parent=5 // pred_check_branch
        %194 = sbr.rel (%p192) target = $region32
      $region31: #{tpu_custom_call.1} parent=5 // pred_region
        // Predicated region
        $region33: #{tpu_custom_call.1} parent=31 // pred_check
          %p195 = pneg %p38
        $region34: #{tpu_custom_call.1} parent=31 // pred_check_branch
          %197 = sbr.rel (%p195) target = $region36
        $region35: #{tpu_custom_call.1} parent=31 // pred_region
          %s198 = sand.u32 %s28, 1
          %s199 = scalar_lea.sflag [#allocation3], %s198
          %s200 = sand.u32 %s28, 1
          %s201 = smul.addr %s200, 64
          %s202 = scalar_lea.vmem [#allocation2], %s201
          %s203 = smul.u32 8, %s18
          %s205 = ssub.s32 1024, 1024
          %206 = vsyncadd %s199, %s205
          %s207 = smul.addr %s203, 128
          %s208 = scalar_lea.hbm %s0, %s207
          %s209 = sshll.u32 %s202, 4
          %s210 = int_to_ptr.vmem [resolvable:$true] %s209
          %215 = dma.hbm_to_vmem [thread:$0]  %s208, 1024, %s210, %s199, 128, 128, 8
        $region36: #{tpu_custom_call.1} parent=31 // pred_fallthru
          _
      $region32: #{tpu_custom_call.1} parent=5 // pred_fallthru
        _
      %p216 = scmp.le.s32.totalorder 1, %s18
      %p217 = scmp.lt.s32.totalorder %s18, 5
      %p218 = pnand %p216, %p217
      %p219 = pneg %p218
      // Predicated region
      $region37: #{tpu_custom_call.1} parent=5 // pred_check
        _
      $region38: #{tpu_custom_call.1} parent=5 // pred_check_branch
        %221 = sbr.rel (%p218) target = $region40
      $region39: #{tpu_custom_call.1} parent=5 // pred_region
        %s222 = ssub.s32 %s18, 1
        %s223 = sand.u32 %s31, 1
        %s224 = scalar_lea.sflag [#allocation3], %s223
        %s225 = sand.u32 %s31, 1
        %s226 = smul.addr %s225, 64
        %s227 = scalar_lea.vmem [#allocation2], %s226
        // Predicated region
        $region41: #{tpu_custom_call.1} parent=39 // pred_check
          %p228 = pneg %p44
        $region42: #{tpu_custom_call.1} parent=39 // pred_check_branch
          %230 = sbr.rel (%p228) target = $region44
        $region43: #{tpu_custom_call.1} parent=39 // pred_region
          %231 = dma.done %s224, 1024
        $region44: #{tpu_custom_call.1} parent=39 // pred_fallthru
          _
        // Predicated region
        $region45: #{tpu_custom_call.1} parent=39 // pred_check
          %p232 = pneg %p65
        $region46: #{tpu_custom_call.1} parent=39 // pred_check_branch
          %234 = sbr.rel (%p232) target = $region48
        $region47: #{tpu_custom_call.1} parent=39 // pred_region
          %235 = dma.done [#allocation6], 4096
        $region48: #{tpu_custom_call.1} parent=39 // pred_fallthru
          _
        %s236 = sand.u32 %s31, 1
        %s237 = scalar_lea.sflag [#allocation3], %s236
        %s238 = sand.u32 %s31, 1
        %s239 = smul.addr %s238, 64
        %s240 = scalar_lea.vmem [#allocation2], %s239
        %p241 = pneg %p44
        %p242 = pneg %p41
        %p243 = pneg %p65
        %p244 = pneg %p62
        %p245 = pneg %p86
        %p246 = pneg %p83
        %p247 = pneg %p107
        %p248 = pneg %p104
        %p249 = pneg %p128
        %p250 = pneg %p125
        %p251 = pneg %p154
        %p252 = pneg %p151
        %s253 = sand.u32 %s141, 1
        %s254 = scalar_lea.sflag [#allocation4], %s253
        %s255 = sand.u32 %s141, 1
        %s256 = smul.addr %s255, 64
        %s257 = scalar_lea.vmem [#allocation7], %s256
        %s258 = smul.u32 8, %s23
        %s259 = smul.u32 8, %s23
        %v260 = vld [vmem:[%s227] sm:$0xff]
        %v261 = vld [vmem:[%s227 + $0x8] sm:$0xff]
        %v262 = vld [vmem:[%s227 + $0x10] sm:$0xff]
        %v263 = vld [vmem:[%s227 + $0x18] sm:$0xff]
        %v264 = vld [vmem:[%s227 + $0x20] sm:$0xff]
        %v265 = vld [vmem:[%s227 + $0x28] sm:$0xff]
        %v266 = vld [vmem:[%s227 + $0x30] sm:$0xff]
        %v267 = vld [vmem:[%s227 + $0x38] sm:$0xff]
        %v268 = vld [vmem:[#allocation5] sm:$0xff]
        %v269 = vld [vmem:[#allocation5 + $0x8] sm:$0xff]
        %v270 = vld [vmem:[#allocation5 + $0x10] sm:$0xff]
        %v271 = vld [vmem:[#allocation5 + $0x18] sm:$0xff]
        %v272 = vld [vmem:[#allocation5 + $0x20] sm:$0xff]
        %v273 = vld [vmem:[#allocation5 + $0x28] sm:$0xff]
        %v274 = vld [vmem:[#allocation5 + $0x30] sm:$0xff]
        %v275 = vld [vmem:[#allocation5 + $0x38] sm:$0xff]
        %v276 = vld [vmem:[#allocation5 + $0x40] sm:$0xff]
        %v277 = vld [vmem:[#allocation5 + $0x48] sm:$0xff]
        %v278 = vld [vmem:[#allocation5 + $0x50] sm:$0xff]
        %v279 = vld [vmem:[#allocation5 + $0x58] sm:$0xff]
        %v280 = vld [vmem:[#allocation5 + $0x60] sm:$0xff]
        %v281 = vld [vmem:[#allocation5 + $0x68] sm:$0xff]
        %v282 = vld [vmem:[#allocation5 + $0x70] sm:$0xff]
        %v283 = vld [vmem:[#allocation5 + $0x78] sm:$0xff]
        %v284 = vld [vmem:[%s2] sm:$0x1]
        %v286 = vlaneseq
        %v287 = vshrl.u32 %v286, 7
        %v288 = vsub.s32 0, %v287
        %v289 = vrot.slane %v284, %v288
        %291 = vmatprep.subr.mxu0 0.0
        %292 = vmatpush1.msra.mxu0 %v283
        %293 = vmatprep.subr.mxu0 0.0
        %294 = vmatpush1.msra.mxu0 %v282
        %295 = vmatprep.subr.mxu0 0.0
        %296 = vmatpush1.msra.mxu0 %v281
        %297 = vmatprep.subr.mxu0 0.0
        %298 = vmatpush1.msra.mxu0 %v280
        %299 = vmatprep.subr.mxu0 0.0
        %300 = vmatpush1.msra.mxu0 %v279
        %301 = vmatprep.subr.mxu0 0.0
        %302 = vmatpush1.msra.mxu0 %v278
        %303 = vmatprep.subr.mxu0 0.0
        %304 = vmatpush1.msra.mxu0 %v277
        %305 = vmatprep.subr.mxu0 0.0
        %306 = vmatpush1.msra.mxu0 %v276
        %307 = vmatprep.subr.mxu0 0.0
        %308 = vmatpush1.msra.mxu0 %v275
        %309 = vmatprep.subr.mxu0 0.0
        %310 = vmatpush1.msra.mxu0 %v274
        %311 = vmatprep.subr.mxu0 0.0
        %312 = vmatpush1.msra.mxu0 %v273
        %313 = vmatprep.subr.mxu0 0.0
        %314 = vmatpush1.msra.mxu0 %v272
        %315 = vmatprep.subr.mxu0 0.0
        %316 = vmatpush1.msra.mxu0 %v271
        %317 = vmatprep.subr.mxu0 0.0
        %318 = vmatpush1.msra.mxu0 %v270
        %319 = vmatprep.subr.mxu0 0.0
        %320 = vmatpush1.msra.mxu0 %v269
        %321 = vmatprep.subr.mxu0 0.0
        %322 = vmatpush1.msra.mxu0 %v268
        %323 = vmatprep.subr.mxu0 0.0
        %324 = vmatpush2.msra.mxu0 0.0
        %325 = vmatprep.subr.mxu0 0.0
        %326 = vmatpush2.msra.mxu0 0.0
        %327 = vmatprep.subr.mxu0 0.0
        %328 = vmatpush2.msra.mxu0 0.0
        %329 = vmatprep.subr.mxu0 0.0
        %330 = vmatpush2.msra.mxu0 0.0
        %331 = vmatprep.subr.mxu0 0.0
        %332 = vmatpush2.msra.mxu0 0.0
        %333 = vmatprep.subr.mxu0 0.0
        %334 = vmatpush2.msra.mxu0 0.0
        %335 = vmatprep.subr.mxu0 0.0
        %336 = vmatpush2.msra.mxu0 0.0
        %337 = vmatprep.subr.mxu0 0.0
        %338 = vmatpush2.msra.mxu0 0.0
        %339 = vmatprep.subr.mxu0 0.0
        %340 = vmatpush2.msra.mxu0 0.0
        %341 = vmatprep.subr.mxu0 0.0
        %342 = vmatpush2.msra.mxu0 0.0
        %343 = vmatprep.subr.mxu0 0.0
        %344 = vmatpush2.msra.mxu0 0.0
        %345 = vmatprep.subr.mxu0 0.0
        %346 = vmatpush2.msra.mxu0 0.0
        %347 = vmatprep.subr.mxu0 0.0
        %348 = vmatpush2.msra.mxu0 0.0
        %349 = vmatprep.subr.mxu0 0.0
        %350 = vmatpush2.msra.mxu0 0.0
        %351 = vmatprep.subr.mxu0 0.0
        %352 = vmatpush2.msra.mxu0 0.0
        %353 = vmatprep.subr.mxu0 0.0
        %354 = vmatpush2.msra.mxu0 0.0
        %355 = vmatprep.mubr.f32.mxu0 0.0
        %356 = vmatmul.mubr.f32.gmra.mxu0 %v260
        %v357 = vpop.f32.mrf.mxu0
        %v358 = vadd.f32 %v289, %v357
        %v359 = vpop.f32.mrf.mxu0
        %360 = vmatprep.mubr.f32.mxu0 0.0
        %361 = vmatmul.mubr.f32.gmra.mxu0 %v261
        %v362 = vpop.f32.mrf.mxu0
        %v363 = vadd.f32 %v289, %v362
        %v364 = vpop.f32.mrf.mxu0
        %365 = vmatprep.mubr.f32.mxu0 0.0
        %366 = vmatmul.mubr.f32.gmra.mxu0 %v262
        %v367 = vpop.f32.mrf.mxu0
        %v368 = vadd.f32 %v289, %v367
        %v369 = vpop.f32.mrf.mxu0
        %370 = vmatprep.mubr.f32.mxu0 0.0
        %371 = vmatmul.mubr.f32.gmra.mxu0 %v263
        %v372 = vpop.f32.mrf.mxu0
        %v373 = vadd.f32 %v289, %v372
        %v374 = vpop.f32.mrf.mxu0
        %375 = vmatprep.mubr.f32.mxu0 0.0
        %376 = vmatmul.mubr.f32.gmra.mxu0 %v264
        %v377 = vpop.f32.mrf.mxu0
        %v378 = vadd.f32 %v289, %v377
        %v379 = vpop.f32.mrf.mxu0
        %380 = vmatprep.mubr.f32.mxu0 0.0
        %381 = vmatmul.mubr.f32.gmra.mxu0 %v265
        %v382 = vpop.f32.mrf.mxu0
        %v383 = vadd.f32 %v289, %v382
        %v384 = vpop.f32.mrf.mxu0
        %385 = vmatprep.mubr.f32.mxu0 0.0
        %386 = vmatmul.mubr.f32.gmra.mxu0 %v266
        %v387 = vpop.f32.mrf.mxu0
        %v388 = vadd.f32 %v289, %v387
        %v389 = vpop.f32.mrf.mxu0
        %390 = vmatprep.mubr.f32.mxu0 0.0
        %391 = vmatmul.mubr.f32.gmra.mxu0 %v267
        %v392 = vpop.f32.mrf.mxu0
        %v393 = vadd.f32 %v289, %v392
        %v394 = vpop.f32.mrf.mxu0
        %395 = vdwg.mxu0
        %v396 = vmax.f32 %v358, 0.0
        %v397 = vmax.f32 %v363, 0.0
        %v398 = vmax.f32 %v368, 0.0
        %v399 = vmax.f32 %v373, 0.0
        %v400 = vmax.f32 %v378, 0.0
        %v401 = vmax.f32 %v383, 0.0
        %v402 = vmax.f32 %v388, 0.0
        %v403 = vmax.f32 %v393, 0.0
        %s404 = scalar_lea.vmem [#allocation5], 128
        %v405 = vld [vmem:[%s404] sm:$0xff]
        %v406 = vld [vmem:[%s404 + $0x8] sm:$0xff]
        %v407 = vld [vmem:[%s404 + $0x10] sm:$0xff]
        %v408 = vld [vmem:[%s404 + $0x18] sm:$0xff]
        %v409 = vld [vmem:[%s404 + $0x20] sm:$0xff]
        %v410 = vld [vmem:[%s404 + $0x28] sm:$0xff]
        %v411 = vld [vmem:[%s404 + $0x30] sm:$0xff]
        %v412 = vld [vmem:[%s404 + $0x38] sm:$0xff]
        %v413 = vld [vmem:[%s404 + $0x40] sm:$0xff]
        %v414 = vld [vmem:[%s404 + $0x48] sm:$0xff]
        %v415 = vld [vmem:[%s404 + $0x50] sm:$0xff]
        %v416 = vld [vmem:[%s404 + $0x58] sm:$0xff]
        %v417 = vld [vmem:[%s404 + $0x60] sm:$0xff]
        %v418 = vld [vmem:[%s404 + $0x68] sm:$0xff]
        %v419 = vld [vmem:[%s404 + $0x70] sm:$0xff]
        %v420 = vld [vmem:[%s404 + $0x78] sm:$0xff]
        %s421 = scalar_lea.vmem %s2, 1
        %v422 = vld [vmem:[%s421] sm:$0x1]
        %v424 = vlaneseq
        %v425 = vshrl.u32 %v424, 7
        %v426 = vsub.s32 0, %v425
        %v427 = vrot.slane %v422, %v426
        %429 = vmatprep.subr.mxu0 0.0
        %430 = vmatpush1.msra.mxu0 %v420
        %431 = vmatprep.subr.mxu0 0.0
        %432 = vmatpush1.msra.mxu0 %v419
        %433 = vmatprep.subr.mxu0 0.0
        %434 = vmatpush1.msra.mxu0 %v418
        %435 = vmatprep.subr.mxu0 0.0
        %436 = vmatpush1.msra.mxu0 %v417
        %437 = vmatprep.subr.mxu0 0.0
        %438 = vmatpush1.msra.mxu0 %v416
        %439 = vmatprep.subr.mxu0 0.0
        %440 = vmatpush1.msra.mxu0 %v415
        %441 = vmatprep.subr.mxu0 0.0
        %442 = vmatpush1.msra.mxu0 %v414
        %443 = vmatprep.subr.mxu0 0.0
        %444 = vmatpush1.msra.mxu0 %v413
        %445 = vmatprep.subr.mxu0 0.0
        %446 = vmatpush1.msra.mxu0 %v412
        %447 = vmatprep.subr.mxu0 0.0
        %448 = vmatpush1.msra.mxu0 %v411
        %449 = vmatprep.subr.mxu0 0.0
        %450 = vmatpush1.msra.mxu0 %v410
        %451 = vmatprep.subr.mxu0 0.0
        %452 = vmatpush1.msra.mxu0 %v409
        %453 = vmatprep.subr.mxu0 0.0
        %454 = vmatpush1.msra.mxu0 %v408
        %455 = vmatprep.subr.mxu0 0.0
        %456 = vmatpush1.msra.mxu0 %v407
        %457 = vmatprep.subr.mxu0 0.0
        %458 = vmatpush1.msra.mxu0 %v406
        %459 = vmatprep.subr.mxu0 0.0
        %460 = vmatpush1.msra.mxu0 %v405
        %461 = vmatprep.subr.mxu0 0.0
        %462 = vmatpush2.msra.mxu0 0.0
        %463 = vmatprep.subr.mxu0 0.0
        %464 = vmatpush2.msra.mxu0 0.0
        %465 = vmatprep.subr.mxu0 0.0
        %466 = vmatpush2.msra.mxu0 0.0
        %467 = vmatprep.subr.mxu0 0.0
        %468 = vmatpush2.msra.mxu0 0.0
        %469 = vmatprep.subr.mxu0 0.0
        %470 = vmatpush2.msra.mxu0 0.0
        %471 = vmatprep.subr.mxu0 0.0
        %472 = vmatpush2.msra.mxu0 0.0
        %473 = vmatprep.subr.mxu0 0.0
        %474 = vmatpush2.msra.mxu0 0.0
        %475 = vmatprep.subr.mxu0 0.0
        %476 = vmatpush2.msra.mxu0 0.0
        %477 = vmatprep.subr.mxu0 0.0
        %478 = vmatpush2.msra.mxu0 0.0
        %479 = vmatprep.subr.mxu0 0.0
        %480 = vmatpush2.msra.mxu0 0.0
        %481 = vmatprep.subr.mxu0 0.0
        %482 = vmatpush2.msra.mxu0 0.0
        %483 = vmatprep.subr.mxu0 0.0
        %484 = vmatpush2.msra.mxu0 0.0
        %485 = vmatprep.subr.mxu0 0.0
        %486 = vmatpush2.msra.mxu0 0.0
        %487 = vmatprep.subr.mxu0 0.0
        %488 = vmatpush2.msra.mxu0 0.0
        %489 = vmatprep.subr.mxu0 0.0
        %490 = vmatpush2.msra.mxu0 0.0
        %491 = vmatprep.subr.mxu0 0.0
        %492 = vmatpush2.msra.mxu0 0.0
        %493 = vmatprep.mubr.f32.mxu0 0.0
        %494 = vmatmul.mubr.f32.gmra.mxu0 %v396
        %v495 = vpop.f32.mrf.mxu0
        %v496 = vadd.f32 %v427, %v495
        %v497 = vpop.f32.mrf.mxu0
        %498 = vmatprep.mubr.f32.mxu0 0.0
        %499 = vmatmul.mubr.f32.gmra.mxu0 %v397
        %v500 = vpop.f32.mrf.mxu0
        %v501 = vadd.f32 %v427, %v500
        %v502 = vpop.f32.mrf.mxu0
        %503 = vmatprep.mubr.f32.mxu0 0.0
        %504 = vmatmul.mubr.f32.gmra.mxu0 %v398
        %v505 = vpop.f32.mrf.mxu0
        %v506 = vadd.f32 %v427, %v505
        %v507 = vpop.f32.mrf.mxu0
        %508 = vmatprep.mubr.f32.mxu0 0.0
        %509 = vmatmul.mubr.f32.gmra.mxu0 %v399
        %v510 = vpop.f32.mrf.mxu0
        %v511 = vadd.f32 %v427, %v510
        %v512 = vpop.f32.mrf.mxu0
        %513 = vmatprep.mubr.f32.mxu0 0.0
        %514 = vmatmul.mubr.f32.gmra.mxu0 %v400
        %v515 = vpop.f32.mrf.mxu0
        %v516 = vadd.f32 %v427, %v515
        %v517 = vpop.f32.mrf.mxu0
        %518 = vmatprep.mubr.f32.mxu0 0.0
        %519 = vmatmul.mubr.f32.gmra.mxu0 %v401
        %v520 = vpop.f32.mrf.mxu0
        %v521 = vadd.f32 %v427, %v520
        %v522 = vpop.f32.mrf.mxu0
        %523 = vmatprep.mubr.f32.mxu0 0.0
        %524 = vmatmul.mubr.f32.gmra.mxu0 %v402
        %v525 = vpop.f32.mrf.mxu0
        %v526 = vadd.f32 %v427, %v525
        %v527 = vpop.f32.mrf.mxu0
        %528 = vmatprep.mubr.f32.mxu0 0.0
        %529 = vmatmul.mubr.f32.gmra.mxu0 %v403
        %v530 = vpop.f32.mrf.mxu0
        %v531 = vadd.f32 %v427, %v530
        %v532 = vpop.f32.mrf.mxu0
        %533 = vdwg.mxu0
        %v534 = vmax.f32 %v496, 0.0
        %v535 = vmax.f32 %v501, 0.0
        %v536 = vmax.f32 %v506, 0.0
        %v537 = vmax.f32 %v511, 0.0
        %v538 = vmax.f32 %v516, 0.0
        %v539 = vmax.f32 %v521, 0.0
        %v540 = vmax.f32 %v526, 0.0
        %v541 = vmax.f32 %v531, 0.0
        %542 = vadd.xlane.f32.xlu0 %v534
        %v543 = vpop.xlane.xlu0 %542
        %544 = vadd.xlane.f32.xlu0 %v535
        %v545 = vpop.xlane.xlu0 %544
        %546 = vadd.xlane.f32.xlu0 %v536
        %v547 = vpop.xlane.xlu0 %546
        %548 = vadd.xlane.f32.xlu0 %v537
        %v549 = vpop.xlane.xlu0 %548
        %550 = vadd.xlane.f32.xlu0 %v538
        %v551 = vpop.xlane.xlu0 %550
        %552 = vadd.xlane.f32.xlu0 %v539
        %v553 = vpop.xlane.xlu0 %552
        %554 = vadd.xlane.f32.xlu0 %v540
        %v555 = vpop.xlane.xlu0 %554
        %556 = vadd.xlane.f32.xlu0 %v541
        %v557 = vpop.xlane.xlu0 %556
        %v558 = vrcp.pop 128.0
        %v559 = vmul.f32 %v543, %v558
        %v560 = vmul.f32 %v545, %v558
        %v561 = vmul.f32 %v547, %v558
        %v562 = vmul.f32 %v549, %v558
        %v563 = vmul.f32 %v551, %v558
        %v564 = vmul.f32 %v553, %v558
        %v565 = vmul.f32 %v555, %v558
        %v566 = vmul.f32 %v557, %v558
        %v567 = vsub.f32 %v534, %v559
        %v568 = vsub.f32 %v535, %v560
        %v569 = vsub.f32 %v536, %v561
        %v570 = vsub.f32 %v537, %v562
        %v571 = vsub.f32 %v538, %v563
        %v572 = vsub.f32 %v539, %v564
        %v573 = vsub.f32 %v540, %v565
        %v574 = vsub.f32 %v541, %v566
        %v575 = vmul.f32 %v567, %v567
        %v576 = vmul.f32 %v568, %v568
        %v577 = vmul.f32 %v569, %v569
        %v578 = vmul.f32 %v570, %v570
        %v579 = vmul.f32 %v571, %v571
        %v580 = vmul.f32 %v572, %v572
        %v581 = vmul.f32 %v573, %v573
        %v582 = vmul.f32 %v574, %v574
        %583 = vadd.xlane.f32.xlu0 %v575
        %v584 = vpop.xlane.xlu0 %583
        %585 = vadd.xlane.f32.xlu0 %v576
        %v586 = vpop.xlane.xlu0 %585
        %587 = vadd.xlane.f32.xlu0 %v577
        %v588 = vpop.xlane.xlu0 %587
        %589 = vadd.xlane.f32.xlu0 %v578
        %v590 = vpop.xlane.xlu0 %589
        %591 = vadd.xlane.f32.xlu0 %v579
        %v592 = vpop.xlane.xlu0 %591
        %593 = vadd.xlane.f32.xlu0 %v580
        %v594 = vpop.xlane.xlu0 %593
        %595 = vadd.xlane.f32.xlu0 %v581
        %v596 = vpop.xlane.xlu0 %595
        %597 = vadd.xlane.f32.xlu0 %v582
        %v598 = vpop.xlane.xlu0 %597
        %v599 = vrcp.pop 127.0
        %v600 = vmul.f32 %v584, %v599
        %v601 = vmul.f32 %v586, %v599
        %v602 = vmul.f32 %v588, %v599
        %v603 = vmul.f32 %v590, %v599
        %v604 = vmul.f32 %v592, %v599
        %v605 = vmul.f32 %v594, %v599
        %v606 = vmul.f32 %v596, %v599
        %v607 = vmul.f32 %v598, %v599
        %v608 = vrsqrt.pop %v600
        %v609 = vmul.f32 %v600, %v608
        %vm610 = vcmp.eq.f32.partialorder %v600, inf
        %v611 = vsel %vm610, %v600, %v609
        %vm612 = vcmp.eq.f32.partialorder %v600, 0.0
        %v613 = vand.u32 %v600, 2147483648
        %v614 = vsel %vm612, %v613, %v611
        %v615 = vrsqrt.pop %v601
        %v616 = vmul.f32 %v601, %v615
        %vm617 = vcmp.eq.f32.partialorder %v601, inf
        %v618 = vsel %vm617, %v601, %v616
        %vm619 = vcmp.eq.f32.partialorder %v601, 0.0
        %v620 = vand.u32 %v601, 2147483648
        %v621 = vsel %vm619, %v620, %v618
        %v622 = vrsqrt.pop %v602
        %v623 = vmul.f32 %v602, %v622
        %vm624 = vcmp.eq.f32.partialorder %v602, inf
        %v625 = vsel %vm624, %v602, %v623
        %vm626 = vcmp.eq.f32.partialorder %v602, 0.0
        %v627 = vand.u32 %v602, 2147483648
        %v628 = vsel %vm626, %v627, %v625
        %v629 = vrsqrt.pop %v603
        %v630 = vmul.f32 %v603, %v629
        %vm631 = vcmp.eq.f32.partialorder %v603, inf
        %v632 = vsel %vm631, %v603, %v630
        %vm633 = vcmp.eq.f32.partialorder %v603, 0.0
        %v634 = vand.u32 %v603, 2147483648
        %v635 = vsel %vm633, %v634, %v632
        %v636 = vrsqrt.pop %v604
        %v637 = vmul.f32 %v604, %v636
        %vm638 = vcmp.eq.f32.partialorder %v604, inf
        %v639 = vsel %vm638, %v604, %v637
        %vm640 = vcmp.eq.f32.partialorder %v604, 0.0
        %v641 = vand.u32 %v604, 2147483648
        %v642 = vsel %vm640, %v641, %v639
        %v643 = vrsqrt.pop %v605
        %v644 = vmul.f32 %v605, %v643
        %vm645 = vcmp.eq.f32.partialorder %v605, inf
        %v646 = vsel %vm645, %v605, %v644
        %vm647 = vcmp.eq.f32.partialorder %v605, 0.0
        %v648 = vand.u32 %v605, 2147483648
        %v649 = vsel %vm647, %v648, %v646
        %v650 = vrsqrt.pop %v606
        %v651 = vmul.f32 %v606, %v650
        %vm652 = vcmp.eq.f32.partialorder %v606, inf
        %v653 = vsel %vm652, %v606, %v651
        %vm654 = vcmp.eq.f32.partialorder %v606, 0.0
        %v655 = vand.u32 %v606, 2147483648
        %v656 = vsel %vm654, %v655, %v653
        %v657 = vrsqrt.pop %v607
        %v658 = vmul.f32 %v607, %v657
        %vm659 = vcmp.eq.f32.partialorder %v607, inf
        %v660 = vsel %vm659, %v607, %v658
        %vm661 = vcmp.eq.f32.partialorder %v607, 0.0
        %v662 = vand.u32 %v607, 2147483648
        %v663 = vsel %vm661, %v662, %v660
        %v664 = vld [vmem:[%s3] sm:$0x1]
        %v666 = vlaneseq
        %v667 = vshrl.u32 %v666, 7
        %v668 = vsub.s32 0, %v667
        %v669 = vrot.slane %v664, %v668
        %v671 = vmul.f32 %v669, %v567
        %v672 = vmul.f32 %v669, %v568
        %v673 = vmul.f32 %v669, %v569
        %v674 = vmul.f32 %v669, %v570
        %v675 = vmul.f32 %v669, %v571
        %v676 = vmul.f32 %v669, %v572
        %v677 = vmul.f32 %v669, %v573
        %v678 = vmul.f32 %v669, %v574
        %v679 = vadd.f32 %v614, 1e-06
        %v680 = vadd.f32 %v621, 1e-06
        %v681 = vadd.f32 %v628, 1e-06
        %v682 = vadd.f32 %v635, 1e-06
        %v683 = vadd.f32 %v642, 1e-06
        %v684 = vadd.f32 %v649, 1e-06
        %v685 = vadd.f32 %v656, 1e-06
        %v686 = vadd.f32 %v663, 1e-06
        %v687 = vrcp.pop %v679
        %v688 = vmul.f32 %v671, %v687
        %v689 = vrcp.pop %v680
        %v690 = vmul.f32 %v672, %v689
        %v691 = vrcp.pop %v681
        %v692 = vmul.f32 %v673, %v691
        %v693 = vrcp.pop %v682
        %v694 = vmul.f32 %v674, %v693
        %v695 = vrcp.pop %v683
        %v696 = vmul.f32 %v675, %v695
        %v697 = vrcp.pop %v684
        %v698 = vmul.f32 %v676, %v697
        %v699 = vrcp.pop %v685
        %v700 = vmul.f32 %v677, %v699
        %v701 = vrcp.pop %v686
        %v702 = vmul.f32 %v678, %v701
        %v703 = vld [vmem:[%s4] sm:$0x1]
        %v705 = vlaneseq
        %v706 = vshrl.u32 %v705, 7
        %v707 = vsub.s32 0, %v706
        %v708 = vrot.slane %v703, %v707
        %v710 = vadd.f32 %v688, %v708
        %v711 = vadd.f32 %v690, %v708
        %v712 = vadd.f32 %v692, %v708
        %v713 = vadd.f32 %v694, %v708
        %v714 = vadd.f32 %v696, %v708
        %v715 = vadd.f32 %v698, %v708
        %v716 = vadd.f32 %v700, %v708
        %v717 = vadd.f32 %v702, %v708
        %718 = vst [vmem:[%s257] sm:$0xff] %v710
        %719 = vst [vmem:[%s257 + $0x8] sm:$0xff] %v711
        %720 = vst [vmem:[%s257 + $0x10] sm:$0xff] %v712
        %721 = vst [vmem:[%s257 + $0x18] sm:$0xff] %v713
        %722 = vst [vmem:[%s257 + $0x20] sm:$0xff] %v714
        %723 = vst [vmem:[%s257 + $0x28] sm:$0xff] %v715
        %724 = vst [vmem:[%s257 + $0x30] sm:$0xff] %v716
        %725 = vst [vmem:[%s257 + $0x38] sm:$0xff] %v717
        %s726 = sand.u32 %s141, 1
        %s727 = scalar_lea.sflag [#allocation4], %s726
        %s728 = sand.u32 %s141, 1
        %s729 = smul.addr %s728, 64
        %s730 = scalar_lea.vmem [#allocation7], %s729
        // Predicated region
        $region49: #{tpu_custom_call.1} parent=39 // pred_check
          %p731 = pneg %p151
        $region50: #{tpu_custom_call.1} parent=39 // pred_check_branch
          %733 = sbr.rel (%p731) target = $region52
        $region51: #{tpu_custom_call.1} parent=39 // pred_region
          %s734 = smul.u32 8, %s23
          %s736 = ssub.s32 1024, 1024
          %737 = vsyncadd %s727, %s736
          %s738 = smul.addr %s734, 128
          %s739 = scalar_lea.hbm %s5, %s738
          %s740 = sshll.u32 %s730, 4
          %s741 = int_to_ptr.vmem [resolvable:$true] %s740
          %746 = dma.vmem_to_hbm [thread:$0]  %s741, 1024, %s739, %s727, 128, 128, 8
        $region52: #{tpu_custom_call.1} parent=39 // pred_fallthru
          _
      $region40: #{tpu_custom_call.1} parent=5 // pred_fallthru
        _
      %p747 = scmp.le.s32.totalorder 2, %s18
      // Predicated region
      $region53: #{tpu_custom_call.1} parent=5 // pred_check
        %p748 = pneg %p747
      $region54: #{tpu_custom_call.1} parent=5 // pred_check_branch
        %750 = sbr.rel (%p748) target = $region56
      $region55: #{tpu_custom_call.1} parent=5 // pred_region
        %s751 = ssub.s32 %s18, 2
        // Predicated region
        $region57: #{tpu_custom_call.1} parent=55 // pred_check
          %p752 = pneg %p157
        $region58: #{tpu_custom_call.1} parent=55 // pred_check_branch
          %754 = sbr.rel (%p752) target = $region60
        $region59: #{tpu_custom_call.1} parent=55 // pred_region
          %s755 = sand.u32 %s142, 1
          %s756 = scalar_lea.sflag [#allocation4], %s755
          %s757 = sand.u32 %s142, 1
          %s758 = smul.addr %s757, 64
          %s759 = scalar_lea.vmem [#allocation7], %s758
          %760 = dma.done %s756, 1024
        $region60: #{tpu_custom_call.1} parent=55 // pred_fallthru
          _
      $region56: #{tpu_custom_call.1} parent=5 // pred_fallthru
        _
    $region6: #{tpu_custom_call.1} parent=1 // loop_footer
      %s22 = sadd.s32 1, %s18
    $region7: #{tpu_custom_call.1} parent=1 // loop_footer_branch
      %17 = sbr.rel target = $region3
    $region8: #{tpu_custom_call.1} parent=1 // loop_exit
      _
    %761 = vsyncpa [#allocation3], 1
    %s762 = scalar_lea.sflag [#allocation3], 1
    %763 = vsyncpa %s762, 1
    %764 = vsyncpa [#allocation6], 1
    %765 = vsyncpa [#allocation4], 1
    %s766 = scalar_lea.sflag [#allocation4], 1
    %767 = vsyncpa %s766, 1

</llo_original>
